<compile_context>
chip_gen: v5e
topology: v5e:2x2
jax: 0.10.0
libtpu: 0.0.40
codegen_flags: <defaults>
</compile_context>

<pallas_src>
import jax
import jax.numpy as jnp
from jax import lax
from jax.experimental import pallas as pl
from jax.experimental.pallas import tpu as pltpu


def mlp_kernel(x_ref, vec_ref, w23_ref, o_ref):
    H = vec_ref.shape[1]
    cd = w23_ref.dtype            # MXU operand dtype (f32; bf16 on v6e/v7x opt-in)

    w1_row = vec_ref[0:1, :]      # [1, H] layer-1 weight (as a row)
    b1 = vec_ref[1:2, :]
    b2 = vec_ref[2:3, :]
    b3 = vec_ref[3:4, :]
    w4_row = vec_ref[4:5, :]      # [1, H] layer-4 weight column, as a row
    b4 = vec_ref[5:6, 0:1]        # [1, 1]

    # layer 1 (in_features == 1): VPU broadcast multiply; the [TB,1] -> [TB,H]
    # broadcast happens here instead of being materialized in HBM.
    h = jnp.maximum(x_ref[...] * w1_row + b1, 0.0)               # [TB, H] f32

    # layers 2-3: 32x32 matmuls on the MXU with f32 accumulation.
    w2 = w23_ref[0:H, :]
    w3 = w23_ref[H:2 * H, :]
    h = jnp.maximum(
        jnp.dot(h.astype(cd), w2, preferred_element_type=jnp.float32) + b2, 0.0)
    h = jnp.maximum(
        jnp.dot(h.astype(cd), w3, preferred_element_type=jnp.float32) + b3, 0.0)

    # layer 4 (out_features == 1): contract over H with the batch on the lane
    # axis -> [1, TB] lane-packed result, stored as one dense row (no 128-wide
    # broadcast, no masked 1-lane stores).
    y = lax.dot_general(
        w4_row.astype(cd), h.astype(cd),
        dimension_numbers=(((1,), (1,)), ((), ())),
        preferred_element_type=jnp.float32) + b4                 # [1, TB]
    o_ref[...] = y.astype(o_ref.dtype)


def pack_params(params, compute_dtype=jnp.float32):
    """One-time packing of the 8 tiny parameter arrays into 2 VMEM tiles.

    Call once (params are static); pass the results to mlp_forward so the
    forward path launches no scatter/concat ops.
    """
    (w1, b1), (w2, b2), (w3, b3), (w4, b4) = params
    H = w1.shape[1]
    assert w1.shape == (1, H) and w4.shape == (H, 1)
    assert w2.shape == (H, H) and w3.shape == (H, H)

    vec = jnp.zeros((8, H), jnp.float32)
    vec = vec.at[0].set(w1[0])           # w1 row
    vec = vec.at[1].set(b1[0])
    vec = vec.at[2].set(b2[0])
    vec = vec.at[3].set(b3[0])
    vec = vec.at[4].set(w4[:, 0])        # w4 column as a row
    vec = vec.at[5, 0].set(b4[0, 0])     # b4 scalar in lane 0

    # MXU operands; compute_dtype=jnp.bfloat16 on v6e/v7x halves weight DMA and
    # uses the native bf16 MXU path (relax the reference tolerance to ~1e-2).
    w23 = jnp.concatenate([w2, w3], axis=0).astype(compute_dtype)
    return vec, w23


def _tile_batch(B):
    """Pick the batch tile: a multiple of 128 (lane-packed output), large to
    amortise per-grid-step pipeline overhead, and >= 2 tiles whenever B > 128
    so both of v7x's TensorCores get work."""
    LANE = 128
    if B <= LANE:
        TB = LANE
    else:
        b_lanes = -(-B // LANE) * LANE               # round up to 128
        half = -(-(b_lanes // 2) // LANE) * LANE     # ~half, rounded up to 128
        TB = max(LANE, min(2048, half))
    Bp = -(-B // TB) * TB
    return TB, Bp


def mlp_forward(x, vec, w23):
    """x: [B, 1] float32. vec, w23: packed parameters from pack_params()."""
    B, F = x.shape
    H = vec.shape[1]
    assert F == 1, "kernel specialised to n_features = 1"
    assert w23.shape == (2 * H, H)

    TB, Bp = _tile_batch(B)
    grid = (Bp // TB,)

    # Zero-pad the batch to a multiple of the tile; padded rows produce
    # relu(b1)-propagated garbage that is sliced off below.
    x_p = jnp.pad(x.astype(jnp.float32), ((0, Bp - B), (0, 0)))   # [Bp, 1]

    out = pl.pallas_call(
        mlp_kernel,
        out_shape=jax.ShapeDtypeStruct((Bp // TB, TB), jnp.float32),
        grid_spec=pltpu.PrefetchScalarGridSpec(
            num_scalar_prefetch=0,
            grid=grid,
            in_specs=[
                pl.BlockSpec((TB, 1), lambda i: (i, 0)),       # batch-tiled x
                pl.BlockSpec((8, H), lambda i: (0, 0)),        # packed vectors (resident)
                pl.BlockSpec((2 * H, H), lambda i: (0, 0)),    # packed w2/w3 (resident)
            ],
            out_specs=pl.BlockSpec((1, TB), lambda i: (i, 0)), # lane-packed rows
        ),
        compiler_params=pltpu.CompilerParams(
            dimension_semantics=("parallel",)),
    )(x_p, vec, w23)

    # (G, TB) -> (Bp, 1) row-major, then drop the padded rows.
    return out.reshape(Bp, 1)[:B]


def init_linear(key, fan_in, fan_out):
    """Deterministic init mimicking torch.nn.Linear (uniform +-1/sqrt(fan_in)).
    Weight returned pre-transposed as [in, out]; bias as [1, out]."""
    kw, kb = jax.random.split(key)
    bound = 1.0 / jnp.sqrt(jnp.float32(fan_in))
    w = jax.random.uniform(kw, (fan_in, fan_out), jnp.float32, -bound, bound)
    b = jax.random.uniform(kb, (1, fan_out), jnp.float32, -bound, bound)
    return w, b


if __name__ == "__main__":
    n_features, n_hidden, n_output = 1, 32, 1

    # Same input as the PyTorch script: linspace(-10, 10, 20) unsqueezed to [20, 1].
    x = jnp.linspace(-10.0, 10.0, 20, dtype=jnp.float32).reshape(20, 1)

    key = jax.random.PRNGKey(0)
    k1, k2, k3, k4 = jax.random.split(key, 4)
    params = (
        init_linear(k1, n_features, n_hidden),
        init_linear(k2, n_hidden, n_hidden),
        init_linear(k3, n_hidden, n_hidden),
        init_linear(k4, n_hidden, n_output),
    )

    # One-time parameter packing (hoisted out of the per-call forward path).
    vec, w23 = pack_params(params)

    fwd = jax.jit(mlp_forward)
    out = jax.block_until_ready(fwd(x, vec, w23))

    # Pure-JAX reference check.
    def ref(x, params):
        (w1, b1), (w2, b2), (w3, b3), (w4, b4) = params
        h = jnp.maximum(x @ w1 + b1, 0.0)
        h = jnp.maximum(h @ w2 + b2, 0.0)
        h = jnp.maximum(h @ w3 + b3, 0.0)
        return h @ w4 + b4

    expected = ref(x, params)
    assert out.shape == (20, n_output), out.shape
    assert jnp.allclose(out, expected, atol=1e-5, rtol=1e-5), "mismatch vs reference"

    print("KERNEL_OK")
</pallas_src>

<mosaic_0001>
module attributes {stable_mosaic.version = 11 : i64} {
  func.func @mlp_kernel(%arg0: i32, %arg1: memref<128x1xf32, #tpu.memory_space<vmem>>, %arg2: memref<8x32xf32, #tpu.memory_space<vmem>>, %arg3: memref<64x32xf32, #tpu.memory_space<vmem>>, %arg4: memref<1x128xf32, #tpu.memory_space<vmem>>) attributes {dimension_semantics = [#tpu.dimension_semantics<parallel>], iteration_bounds = array<i64: 1>, scalar_prefetch = 0 : i64, scratch_operands = 0 : i64, tpu.core_type = #tpu.core_type<tc>, window_params = [{transform_indices = @transform_0, window_bounds = array<i64: 128, 1>}, {pipeline_mode = #tpu.pipeline_mode<synchronous>, transform_indices = @transform_1, window_bounds = array<i64: 8, 32>}, {pipeline_mode = #tpu.pipeline_mode<synchronous>, transform_indices = @transform_2, window_bounds = array<i64: 64, 32>}, {transform_indices = @transform_3, window_bounds = array<i64: 1, 128>}]} {
    %c0 = arith.constant 0 : index
    %c0_0 = arith.constant 0 : index
    %0 = vector.load %arg2[%c0, %c0_0] : memref<8x32xf32, #tpu.memory_space<vmem>>, vector<1x32xf32>
    %c1 = arith.constant 1 : index
    %c0_1 = arith.constant 0 : index
    %1 = vector.load %arg2[%c1, %c0_1] : memref<8x32xf32, #tpu.memory_space<vmem>>, vector<1x32xf32>
    %c2 = arith.constant 2 : index
    %c0_2 = arith.constant 0 : index
    %2 = vector.load %arg2[%c2, %c0_2] : memref<8x32xf32, #tpu.memory_space<vmem>>, vector<1x32xf32>
    %c3 = arith.constant 3 : index
    %c0_3 = arith.constant 0 : index
    %3 = vector.load %arg2[%c3, %c0_3] : memref<8x32xf32, #tpu.memory_space<vmem>>, vector<1x32xf32>
    %c4 = arith.constant 4 : index
    %c0_4 = arith.constant 0 : index
    %4 = vector.load %arg2[%c4, %c0_4] : memref<8x32xf32, #tpu.memory_space<vmem>>, vector<1x32xf32>
    %c5 = arith.constant 5 : index
    %c0_5 = arith.constant 0 : index
    %5 = vector.load %arg2[%c5, %c0_5] : memref<8x32xf32, #tpu.memory_space<vmem>>, vector<1x1xf32>
    %c0_6 = arith.constant 0 : index
    %c0_7 = arith.constant 0 : index
    %6 = vector.load %arg1[%c0_6, %c0_7] : memref<128x1xf32, #tpu.memory_space<vmem>>, vector<128x1xf32>
    %7 = vector.broadcast %6 : vector<128x1xf32> to vector<128x32xf32>
    %8 = vector.broadcast %0 : vector<1x32xf32> to vector<128x32xf32>
    %9 = arith.mulf %7, %8 : vector<128x32xf32>
    %10 = vector.broadcast %1 : vector<1x32xf32> to vector<128x32xf32>
    %11 = arith.addf %9, %10 : vector<128x32xf32>
    %cst = arith.constant 0.000000e+00 : f32
    %12 = vector.broadcast %cst : f32 to vector<128x32xf32>
    %13 = arith.maximumf %11, %12 : vector<128x32xf32>
    %c0_8 = arith.constant 0 : index
    %c0_9 = arith.constant 0 : index
    %14 = vector.load %arg3[%c0_8, %c0_9] : memref<64x32xf32, #tpu.memory_space<vmem>>, vector<32x32xf32>
    %c32 = arith.constant 32 : index
    %c0_10 = arith.constant 0 : index
    %15 = vector.load %arg3[%c32, %c0_10] : memref<64x32xf32, #tpu.memory_space<vmem>>, vector<32x32xf32>
    %cst_11 = arith.constant dense<0.000000e+00> : vector<128x32xf32>
    %16 = tpu.matmul %13, %14, %cst_11 {dimension_numbers = #tpu.dot_dimension_numbers<[1], [0], [0], [1], [0, 0, 1, 1], [], []>} : vector<128x32xf32>, vector<32x32xf32>, vector<128x32xf32> -> vector<128x32xf32>
    %17 = vector.broadcast %2 : vector<1x32xf32> to vector<128x32xf32>
    %18 = arith.addf %16, %17 : vector<128x32xf32>
    %cst_12 = arith.constant 0.000000e+00 : f32
    %19 = vector.broadcast %cst_12 : f32 to vector<128x32xf32>
    %20 = arith.maximumf %18, %19 : vector<128x32xf32>
    %cst_13 = arith.constant dense<0.000000e+00> : vector<128x32xf32>
    %21 = tpu.matmul %20, %15, %cst_13 {dimension_numbers = #tpu.dot_dimension_numbers<[1], [0], [0], [1], [0, 0, 1, 1], [], []>} : vector<128x32xf32>, vector<32x32xf32>, vector<128x32xf32> -> vector<128x32xf32>
    %22 = vector.broadcast %3 : vector<1x32xf32> to vector<128x32xf32>
    %23 = arith.addf %21, %22 : vector<128x32xf32>
    %cst_14 = arith.constant 0.000000e+00 : f32
    %24 = vector.broadcast %cst_14 : f32 to vector<128x32xf32>
    %25 = arith.maximumf %23, %24 : vector<128x32xf32>
    %cst_15 = arith.constant dense<0.000000e+00> : vector<1x128xf32>
    %26 = tpu.matmul %4, %25, %cst_15 {dimension_numbers = #tpu.dot_dimension_numbers<[1], [1], [0], [0], [0, 0, 1, 0], [], []>} : vector<1x32xf32>, vector<128x32xf32>, vector<1x128xf32> -> vector<1x128xf32>
    %27 = vector.broadcast %5 : vector<1x1xf32> to vector<1x128xf32>
    %28 = arith.addf %26, %27 : vector<1x128xf32>
    %c0_16 = arith.constant 0 : index
    %c0_17 = arith.constant 0 : index
    %29 = vector.load %arg4[%c0_16, %c0_17] : memref<1x128xf32, #tpu.memory_space<vmem>>, vector<1x128xf32>
    tpu.vector_store %arg4[%c0_16, %c0_17], %28 {strides = array<i32>} : memref<1x128xf32, #tpu.memory_space<vmem>>, vector<1x128xf32>,
    return
  }
  func.func @transform_0(%arg0: i32) -> (i32, i32) {
    %c0_i32 = arith.constant 0 : i32
    %c0_i32_0 = arith.constant 0 : i32
    return %arg0, %c0_i32 : i32, i32
  }
  func.func @transform_1(%arg0: i32) -> (i32, i32) {
    %c0_i32 = arith.constant 0 : i32
    %c0_i32_0 = arith.constant 0 : i32
    %c0_i32_1 = arith.constant 0 : i32
    return %c0_i32, %c0_i32_0 : i32, i32
  }
  func.func @transform_2(%arg0: i32) -> (i32, i32) {
    %c0_i32 = arith.constant 0 : i32
    %c0_i32_0 = arith.constant 0 : i32
    %c0_i32_1 = arith.constant 0 : i32
    return %c0_i32, %c0_i32_0 : i32, i32
  }
  func.func @transform_3(%arg0: i32) -> (i32, i32) {
    %c0_i32 = arith.constant 0 : i32
    %c0_i32_0 = arith.constant 0 : i32
    return %arg0, %c0_i32 : i32, i32
  }
}

</mosaic_0001>

<llo_original>
// kernel: mlp_forward.1
$region0: #{mlp_forward.1}
  #allocation0 [shape = 'u32[]', space=smem, size = 0x4, offset = 0x4, fixed_abs, tag = 'smem constant byte address 0x4 - core index']
  #allocation1 [shape = 'u32[72,128]{1,0:T(1,128)}', space=vmem, size = 0x9000, scoped, tag = 'internal scratch']
  %s0 = inlined_call_operand.vmem [shape: f32[128,1], index: 0, kind: input, shape index: {}]
  %s1 = inlined_call_operand.vmem [shape: f32[8,32], index: 1, kind: input, shape index: {}]
  %s2 = inlined_call_operand.vmem [shape: f32[64,32], index: 2, kind: input, shape index: {}]
  %s3 = inlined_call_operand.vmem [shape: f32[1,128], index: 3, kind: output, shape index: {}]
  %s4 = sld [smem:[#allocation0]]
  $region22: #{mlp_forward.1} parent=0
    _
  %s6 = ssub.s32 1, %s4
  %s7 = scalar_select 0, %s6, %s4
  // Predicated region
  $region2: #{mlp_forward.1} parent=0 // pred_check
    _
  $region3: #{mlp_forward.1} parent=0 // pred_check_branch
    %9 = sbr.rel (0) target = $region5
  $region4: #{mlp_forward.1} parent=0 // pred_region
    _
  $region5: #{mlp_forward.1} parent=0 // pred_fallthru
    _
  // Predicated region
  $region6: #{mlp_forward.1} parent=0 // pred_check
    _
  $region7: #{mlp_forward.1} parent=0 // pred_check_branch
    %11 = sbr.rel (0) target = $region9
  $region8: #{mlp_forward.1} parent=0 // pred_region
    _
  $region9: #{mlp_forward.1} parent=0 // pred_fallthru
    _
  // Predicated region
  $region10: #{mlp_forward.1} parent=0 // pred_check
    _
  $region11: #{mlp_forward.1} parent=0 // pred_check_branch
    %13 = sbr.rel (0) target = $region13
  $region12: #{mlp_forward.1} parent=0 // pred_region
    _
  $region13: #{mlp_forward.1} parent=0 // pred_fallthru
    _
  %v14 = vld [vmem:[%s1] sm:$0x1]
  %v15 = vld [vmem:[%s1 + $0x1] sm:$0x1]
  %v16 = vld [vmem:[%s1 + $0x2] sm:$0x1]
  %v17 = vld [vmem:[%s1 + $0x3] sm:$0x1]
  %v18 = vld [vmem:[%s1 + $0x4] sm:$0x1]
  %v19 = vld [vmem:[%s1 + $0x5] sm:$0x1]
  %v20 = vld [vmem:[%s0] sm:$0xff]
  %v21 = vld [vmem:[%s0 + $0x8] sm:$0xff]
  %v22 = vld [vmem:[%s0 + $0x10] sm:$0xff]
  %v23 = vld [vmem:[%s0 + $0x18] sm:$0xff]
  %v24 = vld [vmem:[%s0 + $0x20] sm:$0xff]
  %v25 = vld [vmem:[%s0 + $0x28] sm:$0xff]
  %v26 = vld [vmem:[%s0 + $0x30] sm:$0xff]
  %v27 = vld [vmem:[%s0 + $0x38] sm:$0xff]
  %v28 = vld [vmem:[%s0 + $0x40] sm:$0xff]
  %v29 = vld [vmem:[%s0 + $0x48] sm:$0xff]
  %v30 = vld [vmem:[%s0 + $0x50] sm:$0xff]
  %v31 = vld [vmem:[%s0 + $0x58] sm:$0xff]
  %v32 = vld [vmem:[%s0 + $0x60] sm:$0xff]
  %v33 = vld [vmem:[%s0 + $0x68] sm:$0xff]
  %v34 = vld [vmem:[%s0 + $0x70] sm:$0xff]
  %v35 = vld [vmem:[%s0 + $0x78] sm:$0xff]
  %37 = vset.pattern.permute.xlu0 0
  %38 = vperm.xlu0 %37, %v20
  %v39 = vpop.permute.xlu0 %38
  %42 = vset.pattern.permute.xlu0 0
  %43 = vperm.xlu0 %42, %v21
  %v44 = vpop.permute.xlu0 %43
  %47 = vset.pattern.permute.xlu0 0
  %48 = vperm.xlu0 %47, %v22
  %v49 = vpop.permute.xlu0 %48
  %52 = vset.pattern.permute.xlu0 0
  %53 = vperm.xlu0 %52, %v23
  %v54 = vpop.permute.xlu0 %53
  %57 = vset.pattern.permute.xlu0 0
  %58 = vperm.xlu0 %57, %v24
  %v59 = vpop.permute.xlu0 %58
  %62 = vset.pattern.permute.xlu0 0
  %63 = vperm.xlu0 %62, %v25
  %v64 = vpop.permute.xlu0 %63
  %67 = vset.pattern.permute.xlu0 0
  %68 = vperm.xlu0 %67, %v26
  %v69 = vpop.permute.xlu0 %68
  %72 = vset.pattern.permute.xlu0 0
  %73 = vperm.xlu0 %72, %v27
  %v74 = vpop.permute.xlu0 %73
  %77 = vset.pattern.permute.xlu0 0
  %78 = vperm.xlu0 %77, %v28
  %v79 = vpop.permute.xlu0 %78
  %82 = vset.pattern.permute.xlu0 0
  %83 = vperm.xlu0 %82, %v29
  %v84 = vpop.permute.xlu0 %83
  %87 = vset.pattern.permute.xlu0 0
  %88 = vperm.xlu0 %87, %v30
  %v89 = vpop.permute.xlu0 %88
  %92 = vset.pattern.permute.xlu0 0
  %93 = vperm.xlu0 %92, %v31
  %v94 = vpop.permute.xlu0 %93
  %97 = vset.pattern.permute.xlu0 0
  %98 = vperm.xlu0 %97, %v32
  %v99 = vpop.permute.xlu0 %98
  %102 = vset.pattern.permute.xlu0 0
  %103 = vperm.xlu0 %102, %v33
  %v104 = vpop.permute.xlu0 %103
  %107 = vset.pattern.permute.xlu0 0
  %108 = vperm.xlu0 %107, %v34
  %v109 = vpop.permute.xlu0 %108
  %112 = vset.pattern.permute.xlu0 0
  %113 = vperm.xlu0 %112, %v35
  %v114 = vpop.permute.xlu0 %113
  %v116 = vperm.slane %v14, 0
  %v117 = vmul.f32 %v39, %v116
  %v118 = vmul.f32 %v44, %v116
  %v119 = vmul.f32 %v49, %v116
  %v120 = vmul.f32 %v54, %v116
  %v121 = vmul.f32 %v59, %v116
  %v122 = vmul.f32 %v64, %v116
  %v123 = vmul.f32 %v69, %v116
  %v124 = vmul.f32 %v74, %v116
  %v125 = vmul.f32 %v79, %v116
  %v126 = vmul.f32 %v84, %v116
  %v127 = vmul.f32 %v89, %v116
  %v128 = vmul.f32 %v94, %v116
  %v129 = vmul.f32 %v99, %v116
  %v130 = vmul.f32 %v104, %v116
  %v131 = vmul.f32 %v109, %v116
  %v132 = vmul.f32 %v114, %v116
  %v133 = vperm.slane %v15, 0
  %v134 = vadd.f32 %v117, %v133
  %v135 = vadd.f32 %v118, %v133
  %v136 = vadd.f32 %v119, %v133
  %v137 = vadd.f32 %v120, %v133
  %v138 = vadd.f32 %v121, %v133
  %v139 = vadd.f32 %v122, %v133
  %v140 = vadd.f32 %v123, %v133
  %v141 = vadd.f32 %v124, %v133
  %v142 = vadd.f32 %v125, %v133
  %v143 = vadd.f32 %v126, %v133
  %v144 = vadd.f32 %v127, %v133
  %v145 = vadd.f32 %v128, %v133
  %v146 = vadd.f32 %v129, %v133
  %v147 = vadd.f32 %v130, %v133
  %v148 = vadd.f32 %v131, %v133
  %v149 = vadd.f32 %v132, %v133
  %v150 = vmax.f32 %v134, 0.0
  %v151 = vmax.f32 %v135, 0.0
  %v152 = vmax.f32 %v136, 0.0
  %v153 = vmax.f32 %v137, 0.0
  %v154 = vmax.f32 %v138, 0.0
  %v155 = vmax.f32 %v139, 0.0
  %v156 = vmax.f32 %v140, 0.0
  %v157 = vmax.f32 %v141, 0.0
  %v158 = vmax.f32 %v142, 0.0
  %v159 = vmax.f32 %v143, 0.0
  %v160 = vmax.f32 %v144, 0.0
  %v161 = vmax.f32 %v145, 0.0
  %v162 = vmax.f32 %v146, 0.0
  %v163 = vmax.f32 %v147, 0.0
  %v164 = vmax.f32 %v148, 0.0
  %v165 = vmax.f32 %v149, 0.0
  %v166 = vld [vmem:[%s2] sm:$0xff]
  %v167 = vld [vmem:[%s2 + $0x8] sm:$0xff]
  %v168 = vld [vmem:[%s2 + $0x10] sm:$0xff]
  %v169 = vld [vmem:[%s2 + $0x18] sm:$0xff]
  %v170 = vld [vmem:[%s2 + $0x20] sm:$0xff]
  %v171 = vld [vmem:[%s2 + $0x28] sm:$0xff]
  %v172 = vld [vmem:[%s2 + $0x30] sm:$0xff]
  %v173 = vld [vmem:[%s2 + $0x38] sm:$0xff]
  %v174 = vperm.slane %v16, 0
  %vm175 = vcmask 261120
  %v177 = vsel %vm175, %v150, 0
  %v180 = vsel %vm175, %v151, 0
  %v183 = vsel %vm175, %v152, 0
  %v186 = vsel %vm175, %v153, 0
  %v189 = vsel %vm175, %v154, 0
  %v192 = vsel %vm175, %v155, 0
  %v195 = vsel %vm175, %v156, 0
  %v198 = vsel %vm175, %v157, 0
  %v201 = vsel %vm175, %v158, 0
  %v204 = vsel %vm175, %v159, 0
  %v207 = vsel %vm175, %v160, 0
  %v210 = vsel %vm175, %v161, 0
  %v213 = vsel %vm175, %v162, 0
  %v216 = vsel %vm175, %v163, 0
  %v219 = vsel %vm175, %v164, 0
  %v222 = vsel %vm175, %v165, 0
  %224 = vmatpush.msra.mxu0 0.0
  %225 = vmatpush.msra.mxu0 0.0
  %226 = vmatpush.msra.mxu0 0.0
  %227 = vmatpush.msra.mxu0 0.0
  %228 = vmatpush.msra.mxu0 0.0
  %229 = vmatpush.msra.mxu0 0.0
  %230 = vmatpush.msra.mxu0 0.0
  %231 = vmatpush.msra.mxu0 0.0
  %232 = vmatpush.msra.mxu0 0.0
  %233 = vmatpush.msra.mxu0 0.0
  %234 = vmatpush.msra.mxu0 0.0
  %235 = vmatpush.msra.mxu0 0.0
  %236 = vmatpush.msra.mxu0 %v169
  %237 = vmatpush.msra.mxu0 %v168
  %238 = vmatpush.msra.mxu0 %v167
  %239 = vmatpush.msra.mxu0 %v166
  %240 = vmatmul.f32.gmra.mxu0 %v177
  %v241 = vpop.f32.mrf.mxu0
  %v242 = vadd.f32 %v174, %v241
  %243 = vmatmul.f32.gmra.mxu0 %v180
  %v244 = vpop.f32.mrf.mxu0
  %v245 = vadd.f32 %v174, %v244
  %246 = vmatmul.f32.gmra.mxu0 %v183
  %v247 = vpop.f32.mrf.mxu0
  %v248 = vadd.f32 %v174, %v247
  %249 = vmatmul.f32.gmra.mxu0 %v186
  %v250 = vpop.f32.mrf.mxu0
  %v251 = vadd.f32 %v174, %v250
  %252 = vmatmul.f32.gmra.mxu0 %v189
  %v253 = vpop.f32.mrf.mxu0
  %v254 = vadd.f32 %v174, %v253
  %255 = vmatmul.f32.gmra.mxu0 %v192
  %v256 = vpop.f32.mrf.mxu0
  %v257 = vadd.f32 %v174, %v256
  %258 = vmatmul.f32.gmra.mxu0 %v195
  %v259 = vpop.f32.mrf.mxu0
  %v260 = vadd.f32 %v174, %v259
  %261 = vmatmul.f32.gmra.mxu0 %v198
  %v262 = vpop.f32.mrf.mxu0
  %v263 = vadd.f32 %v174, %v262
  %264 = vmatmul.f32.gmra.mxu0 %v201
  %v265 = vpop.f32.mrf.mxu0
  %v266 = vadd.f32 %v174, %v265
  %267 = vmatmul.f32.gmra.mxu0 %v204
  %v268 = vpop.f32.mrf.mxu0
  %v269 = vadd.f32 %v174, %v268
  %270 = vmatmul.f32.gmra.mxu0 %v207
  %v271 = vpop.f32.mrf.mxu0
  %v272 = vadd.f32 %v174, %v271
  %273 = vmatmul.f32.gmra.mxu0 %v210
  %v274 = vpop.f32.mrf.mxu0
  %v275 = vadd.f32 %v174, %v274
  %276 = vmatmul.f32.gmra.mxu0 %v213
  %v277 = vpop.f32.mrf.mxu0
  %v278 = vadd.f32 %v174, %v277
  %279 = vmatmul.f32.gmra.mxu0 %v216
  %v280 = vpop.f32.mrf.mxu0
  %v281 = vadd.f32 %v174, %v280
  %282 = vmatmul.f32.gmra.mxu0 %v219
  %v283 = vpop.f32.mrf.mxu0
  %v284 = vadd.f32 %v174, %v283
  %285 = vmatmul.f32.gmra.mxu0 %v222
  %v286 = vpop.f32.mrf.mxu0
  %v287 = vadd.f32 %v174, %v286
  %288 = vdwg.mxu0
  %v289 = vmax.f32 %v242, 0.0
  %v290 = vmax.f32 %v245, 0.0
  %v291 = vmax.f32 %v248, 0.0
  %v292 = vmax.f32 %v251, 0.0
  %v293 = vmax.f32 %v254, 0.0
  %v294 = vmax.f32 %v257, 0.0
  %v295 = vmax.f32 %v260, 0.0
  %v296 = vmax.f32 %v263, 0.0
  %v297 = vmax.f32 %v266, 0.0
  %v298 = vmax.f32 %v269, 0.0
  %v299 = vmax.f32 %v272, 0.0
  %v300 = vmax.f32 %v275, 0.0
  %v301 = vmax.f32 %v278, 0.0
  %v302 = vmax.f32 %v281, 0.0
  %v303 = vmax.f32 %v284, 0.0
  %v304 = vmax.f32 %v287, 0.0
  %v305 = vperm.slane %v17, 0
  %v307 = vsel %vm175, %v289, 0
  %v310 = vsel %vm175, %v290, 0
  %v313 = vsel %vm175, %v291, 0
  %v316 = vsel %vm175, %v292, 0
  %v319 = vsel %vm175, %v293, 0
  %v322 = vsel %vm175, %v294, 0
  %v325 = vsel %vm175, %v295, 0
  %v328 = vsel %vm175, %v296, 0
  %v331 = vsel %vm175, %v297, 0
  %v334 = vsel %vm175, %v298, 0
  %v337 = vsel %vm175, %v299, 0
  %v340 = vsel %vm175, %v300, 0
  %v343 = vsel %vm175, %v301, 0
  %v346 = vsel %vm175, %v302, 0
  %v349 = vsel %vm175, %v303, 0
  %v352 = vsel %vm175, %v304, 0
  %354 = vmatpush.msra.mxu0 0.0
  %355 = vmatpush.msra.mxu0 0.0
  %356 = vmatpush.msra.mxu0 0.0
  %357 = vmatpush.msra.mxu0 0.0
  %358 = vmatpush.msra.mxu0 0.0
  %359 = vmatpush.msra.mxu0 0.0
  %360 = vmatpush.msra.mxu0 0.0
  %361 = vmatpush.msra.mxu0 0.0
  %362 = vmatpush.msra.mxu0 0.0
  %363 = vmatpush.msra.mxu0 0.0
  %364 = vmatpush.msra.mxu0 0.0
  %365 = vmatpush.msra.mxu0 0.0
  %366 = vmatpush.msra.mxu0 %v173
  %367 = vmatpush.msra.mxu0 %v172
  %368 = vmatpush.msra.mxu0 %v171
  %369 = vmatpush.msra.mxu0 %v170
  %370 = vmatmul.f32.gmra.mxu0 %v307
  %v371 = vpop.f32.mrf.mxu0
  %v372 = vadd.f32 %v305, %v371
  %373 = vmatmul.f32.gmra.mxu0 %v310
  %v374 = vpop.f32.mrf.mxu0
  %v375 = vadd.f32 %v305, %v374
  %376 = vmatmul.f32.gmra.mxu0 %v313
  %v377 = vpop.f32.mrf.mxu0
  %v378 = vadd.f32 %v305, %v377
  %379 = vmatmul.f32.gmra.mxu0 %v316
  %v380 = vpop.f32.mrf.mxu0
  %v381 = vadd.f32 %v305, %v380
  %382 = vmatmul.f32.gmra.mxu0 %v319
  %v383 = vpop.f32.mrf.mxu0
  %v384 = vadd.f32 %v305, %v383
  %385 = vmatmul.f32.gmra.mxu0 %v322
  %v386 = vpop.f32.mrf.mxu0
  %v387 = vadd.f32 %v305, %v386
  %388 = vmatmul.f32.gmra.mxu0 %v325
  %v389 = vpop.f32.mrf.mxu0
  %v390 = vadd.f32 %v305, %v389
  %391 = vmatmul.f32.gmra.mxu0 %v328
  %v392 = vpop.f32.mrf.mxu0
  %v393 = vadd.f32 %v305, %v392
  %394 = vmatmul.f32.gmra.mxu0 %v331
  %v395 = vpop.f32.mrf.mxu0
  %v396 = vadd.f32 %v305, %v395
  %397 = vmatmul.f32.gmra.mxu0 %v334
  %v398 = vpop.f32.mrf.mxu0
  %v399 = vadd.f32 %v305, %v398
  %400 = vmatmul.f32.gmra.mxu0 %v337
  %v401 = vpop.f32.mrf.mxu0
  %v402 = vadd.f32 %v305, %v401
  %403 = vmatmul.f32.gmra.mxu0 %v340
  %v404 = vpop.f32.mrf.mxu0
  %v405 = vadd.f32 %v305, %v404
  %406 = vmatmul.f32.gmra.mxu0 %v343
  %v407 = vpop.f32.mrf.mxu0
  %v408 = vadd.f32 %v305, %v407
  %409 = vmatmul.f32.gmra.mxu0 %v346
  %v410 = vpop.f32.mrf.mxu0
  %v411 = vadd.f32 %v305, %v410
  %412 = vmatmul.f32.gmra.mxu0 %v349
  %v413 = vpop.f32.mrf.mxu0
  %v414 = vadd.f32 %v305, %v413
  %415 = vmatmul.f32.gmra.mxu0 %v352
  %v416 = vpop.f32.mrf.mxu0
  %v417 = vadd.f32 %v305, %v416
  %418 = vdwg.mxu0
  %v419 = vmax.f32 %v372, 0.0
  %v420 = vmax.f32 %v375, 0.0
  %v421 = vmax.f32 %v378, 0.0
  %v422 = vmax.f32 %v381, 0.0
  %v423 = vmax.f32 %v384, 0.0
  %v424 = vmax.f32 %v387, 0.0
  %v425 = vmax.f32 %v390, 0.0
  %v426 = vmax.f32 %v393, 0.0
  %v427 = vmax.f32 %v396, 0.0
  %v428 = vmax.f32 %v399, 0.0
  %v429 = vmax.f32 %v402, 0.0
  %v430 = vmax.f32 %v405, 0.0
  %v431 = vmax.f32 %v408, 0.0
  %v432 = vmax.f32 %v411, 0.0
  %v433 = vmax.f32 %v414, 0.0
  %v434 = vmax.f32 %v417, 0.0
  %436 = vset.pattern.permute.xlu0 0
  %437 = vperm.xlu0 %436, %v19
  %v438 = vpop.permute.xlu0 %437
  %v441 = vsel %vm175, %v18, 0
  %v444 = vsel %vm175, %v419, 0
  %v447 = vsel %vm175, %v420, 0
  %v450 = vsel %vm175, %v421, 0
  %v453 = vsel %vm175, %v422, 0
  %v456 = vsel %vm175, %v423, 0
  %v459 = vsel %vm175, %v424, 0
  %v462 = vsel %vm175, %v425, 0
  %v465 = vsel %vm175, %v426, 0
  %v468 = vsel %vm175, %v427, 0
  %v471 = vsel %vm175, %v428, 0
  %v474 = vsel %vm175, %v429, 0
  %v477 = vsel %vm175, %v430, 0
  %v480 = vsel %vm175, %v431, 0
  %v483 = vsel %vm175, %v432, 0
  %v486 = vsel %vm175, %v433, 0
  %v489 = vsel %vm175, %v434, 0
  %491 = vmatpush.xpose.msra.mxu0 %v489
  %492 = vmatpush.xpose.msra.mxu0 %v486
  %493 = vmatpush.xpose.msra.mxu0 %v483
  %494 = vmatpush.xpose.msra.mxu0 %v480
  %495 = vmatpush.xpose.msra.mxu0 %v477
  %496 = vmatpush.xpose.msra.mxu0 %v474
  %497 = vmatpush.xpose.msra.mxu0 %v471
  %498 = vmatpush.xpose.msra.mxu0 %v468
  %499 = vmatpush.xpose.msra.mxu0 %v465
  %500 = vmatpush.xpose.msra.mxu0 %v462
  %501 = vmatpush.xpose.msra.mxu0 %v459
  %502 = vmatpush.xpose.msra.mxu0 %v456
  %503 = vmatpush.xpose.msra.mxu0 %v453
  %504 = vmatpush.xpose.msra.mxu0 %v450
  %505 = vmatpush.xpose.msra.mxu0 %v447
  %506 = vmatpush.xpose.msra.mxu0 %v444
  %507 = vmatmul.f32.gmra.mxu0 %v441
  %v508 = vpop.f32.mrf.mxu0
  %v509 = vadd.f32 %v438, %v508
  %510 = vdwg.mxu0
  %511 = vst [vmem:[%s3] sm:$0x1] %v509
  // Predicated region
  $region14: #{mlp_forward.1} parent=0 // pred_check
    _
  $region15: #{mlp_forward.1} parent=0 // pred_check_branch
    %513 = sbr.rel (0) target = $region17
  $region16: #{mlp_forward.1} parent=0 // pred_region
    _
  $region17: #{mlp_forward.1} parent=0 // pred_fallthru
    _
  // Predicated region
  $region18: #{mlp_forward.1} parent=0 // pred_check
    _
  $region19: #{mlp_forward.1} parent=0 // pred_check_branch
    %515 = sbr.rel (0) target = $region21
  $region20: #{mlp_forward.1} parent=0 // pred_region
    _
  $region21: #{mlp_forward.1} parent=0 // pred_fallthru
    _

</llo_original>
